<compile_context>
chip_gen: v5e
topology: v5e:2x2
jax: 0.10.0
libtpu: 0.0.40
codegen_flags: <defaults>
</compile_context>

<pallas_src>
import jax
import jax.numpy as jnp
from jax import lax
from jax.experimental import pallas as pl
from jax.experimental.pallas import tpu as pltpu

JITTER = 0.001


# ----------------------------- Pallas kernel ------------------------------ #
def _gp_forward_kernel(params_ref, xte_ref, xm_ref, zs_ref, qu_ref, w_ref,
                       ypred_ref, yvar_ref):
    # params_ref lives in SMEM: [inv_ls2, log_sigma2, sigma2 + noise]
    inv_ls2 = params_ref[0]
    log_sigma2 = params_ref[1]
    diag_const = params_ref[2]            # sigma2 + noise

    x = xte_ref[...]                      # (TN, D) test-point tile
    # Fold 1/ls^2 into z once per tile: (M, D) scalar mul instead of an
    # (M, TN) mul on the distance matrix below.
    z = xm_ref[...] * inv_ls2             # (M, D) inducing points (resident)

    # xz[j, i] = <z_j, x_i> / ls^2; contract the last dims of both operands so
    # the MXU gets the contraction on the minor dim directly (no z.T / x.T).
    xz = lax.dot_general(z, x, (((1,), (1,)), ((), ())),
                         preferred_element_type=jnp.float32)            # (M, TN)

    # -0.5/ls^2 * ||x_i||^2 as a lane-dense (1, TN) row via a tiny matvec
    # (avoids a (TN,1) column that would need a cross-lane relayout).
    ones_row = jnp.ones((1, x.shape[1]), dtype=jnp.float32)
    xs = lax.dot_general(ones_row, x * x, (((1,), (1,)), ((), ())),
                         preferred_element_type=jnp.float32)             # (1, TN)
    xs = (-0.5 * inv_ls2) * xs

    # exponent = log(sigma2) - 0.5 * ||z_j - x_i||^2 / ls^2
    #   (zs already carries -0.5/ls^2 * ||z_j||^2 + log sigma2); clamping the
    #   exponent at log(sigma2) is exactly the reference's sq >= 0 clamp.
    expo = jnp.minimum(xz + zs_ref[...] + xs, log_sigma2)               # (M, TN)
    k_mt = jnp.exp(expo)                  # = sigma2 * exp(-0.5 d^2 / ls^2)

    # tmp = K_mm^{-1} @ K_mt  -- single MXU matmul, lane-dense TN output cols.
    # TODO(synk): for large M (>=512) cast k_mt / W to bfloat16 here (keep f32
    #             accumulation) to roughly double MXU throughput on v6e/v7x.
    tmp = jnp.dot(w_ref[...], k_mt, preferred_element_type=jnp.float32)  # (M, TN)

    # y_pred^T = qu_mean^T @ (K_mm^{-1} K_mt): VPU multiply + small sublane sum.
    ypred_ref[...] = jnp.sum(qu_ref[...] * tmp, axis=0, keepdims=True)   # (1, TN)

    # diag(K_tm K_mm^{-1} K_tm^T) = column-sum(tmp * K_mt)
    quad = jnp.sum(tmp * k_mt, axis=0, keepdims=True)                    # (1, TN)

    # k(x,x).diag() for RBF is sigma2 (zero distance); + noise folded in.
    yvar_ref[...] = diag_const - quad


# ------------------------------ JAX wrapper -------------------------------- #
def _pick_tile_n(n):
    """Largest lane-aligned tile (multiple of 128) keeping >=2 grid steps
    (v7x has 2 TensorCores); falls back to one full-width tile for tiny N."""
    for t in (1024, 512, 256, 128):
        if n % t == 0 and n // t >= 2:
            return t
    for t in (1024, 512, 256, 128):
        if n % t == 0:
            return t
    return n


def parametric_gp_forward(xte, xm, qu_mean, log_beta,
                          sigma2=1.0, lengthscale=1.0, *, tile_n=None):
    """Pallas implementation of parametricGP.forward(xte) -> (y_pred, y_var)."""
    xte = xte.astype(jnp.float32)
    xm = xm.astype(jnp.float32)
    qu_mean = qu_mean.astype(jnp.float32)

    n, d = xte.shape
    m = xm.shape[0]
    if tile_n is None:
        tile_n = _pick_tile_n(n)
    assert n % tile_n == 0, "N must be a multiple of the tile size"

    ls2 = jnp.float32(lengthscale) ** 2
    sig2 = jnp.float32(sigma2)
    inv_ls2 = 1.0 / ls2
    log_sig2 = jnp.log(sig2)

    # --- small (M, M) work stays in plain JAX (glue) ---
    sq_mm = (jnp.sum(xm * xm, -1, keepdims=True)
             + jnp.sum(xm * xm, -1)[None, :]
             - 2.0 * xm @ xm.T)
    k_mm = sig2 * jnp.exp(-0.5 * jnp.maximum(sq_mm, 0.0) * inv_ls2)
    k_mm = k_mm + JITTER * jnp.eye(m, dtype=jnp.float32)

    # K_mm^{-1} via Cholesky (more stable than an explicit inverse in fp32).
    cf = jax.scipy.linalg.cho_factor(k_mm)
    w = jax.scipy.linalg.cho_solve(cf, jnp.eye(m, dtype=jnp.float32))    # (M, M)

    # Grid-invariant bias: -0.5/ls^2 * ||z_j||^2 + log(sigma2)  (pre-folded).
    zs = (-0.5 * inv_ls2 * jnp.sum(xm * xm, axis=-1, keepdims=True)
          + log_sig2)                                                     # (M, 1)

    noise = jnp.exp(-log_beta.astype(jnp.float32))[0]   # log_beta.exp().pow(-1)
    params = jnp.array([inv_ls2, log_sig2, sig2 + noise], dtype=jnp.float32)

    grid = (n // tile_n,)
    grid_spec = pltpu.PrefetchScalarGridSpec(
        num_scalar_prefetch=1,                 # `params` -> SMEM
        grid=grid,
        in_specs=[
            pl.BlockSpec((tile_n, d), lambda i, p: (i, 0)),   # xte tile
            pl.BlockSpec((m, d), lambda i, p: (0, 0)),        # xm (resident)
            pl.BlockSpec((m, 1), lambda i, p: (0, 0)),        # scaled z norms
            pl.BlockSpec((m, 1), lambda i, p: (0, 0)),        # qu_mean
            pl.BlockSpec((m, m), lambda i, p: (0, 0)),        # W = K_mm^{-1}
        ],
        out_specs=[
            pl.BlockSpec((1, tile_n), lambda i, p: (0, i)),   # y_pred row
            pl.BlockSpec((1, tile_n), lambda i, p: (0, i)),   # y_var  row
        ],
    )

    y_pred_row, y_var_row = pl.pallas_call(
        _gp_forward_kernel,
        out_shape=(jax.ShapeDtypeStruct((1, n), jnp.float32),
                   jax.ShapeDtypeStruct((1, n), jnp.float32)),
        grid_spec=grid_spec,
        compiler_params=pltpu.CompilerParams(
            dimension_semantics=("parallel",)),
    )(params, xte, xm, zs, qu_mean, w)

    return y_pred_row.reshape(n, 1), y_var_row.reshape(n, 1)


# ------------------------------ reference ---------------------------------- #
def _rbf(a, b, sigma2, ls2):
    sq = (jnp.sum(a * a, -1, keepdims=True) + jnp.sum(b * b, -1)[None, :]
          - 2.0 * a @ b.T)
    return sigma2 * jnp.exp(-0.5 * jnp.maximum(sq, 0.0) / ls2)


def _reference_forward(xte, xm, qu_mean, log_beta, sigma2=1.0, lengthscale=1.0):
    ls2 = lengthscale ** 2
    m = xm.shape[0]
    k_mm = _rbf(xm, xm, sigma2, ls2) + JITTER * jnp.eye(m, dtype=xm.dtype)
    k_tm = _rbf(xte, xm, sigma2, ls2)
    k_tt_diag = jnp.diag(_rbf(xte, xte, sigma2, ls2))
    y_pred = k_tm @ jnp.linalg.solve(k_mm, qu_mean)
    y_var = (k_tt_diag
             - jnp.diag(k_tm @ jnp.linalg.solve(k_mm, k_tm.T))
             + jnp.exp(-log_beta)[0])
    return y_pred, y_var.reshape(-1, 1)


# --------------------------------- main ------------------------------------ #
if __name__ == "__main__":
    input_dim = 8
    num_inducing = 32
    n_test = 256            # lane-aligned: tile_n=128 -> 2 parallel grid steps

    key = jax.random.PRNGKey(0)
    k1, k2, k3 = jax.random.split(key, 3)

    # Deterministic "parameters" (torch.rand -> uniform [0,1))
    xm = jax.random.uniform(k1, (num_inducing, input_dim), dtype=jnp.float32)
    qu_mean = jax.random.uniform(k2, (num_inducing, 1), dtype=jnp.float32)
    log_beta = jnp.ones((1,), dtype=jnp.float32) * -4.0

    # Test inputs
    xte = jax.random.uniform(k3, (n_test, input_dim), dtype=jnp.float32)

    y_pred, y_var = parametric_gp_forward(xte, xm, qu_mean, log_beta)
    jax.block_until_ready((y_pred, y_var))

    yp_ref, yv_ref = _reference_forward(xte, xm, qu_mean, log_beta)

    assert y_pred.shape == (n_test, 1) and y_var.shape == (n_test, 1)
    assert jnp.allclose(y_pred, yp_ref, rtol=2e-3, atol=5e-3)
    assert jnp.allclose(y_var, yv_ref, rtol=2e-3, atol=5e-3)

    print("KERNEL_OK")
</pallas_src>

<mosaic_0001>
module attributes {stable_mosaic.version = 11 : i64} {
  func.func @_gp_forward_kernel(%arg0: i32, %arg1: memref<3xf32, #tpu.memory_space<smem>>, %arg2: memref<128x8xf32, #tpu.memory_space<vmem>>, %arg3: memref<32x8xf32, #tpu.memory_space<vmem>>, %arg4: memref<32x1xf32, #tpu.memory_space<vmem>>, %arg5: memref<32x1xf32, #tpu.memory_space<vmem>>, %arg6: memref<32x32xf32, #tpu.memory_space<vmem>>, %arg7: memref<1x128xf32, #tpu.memory_space<vmem>>, %arg8: memref<1x128xf32, #tpu.memory_space<vmem>>) attributes {dimension_semantics = [#tpu.dimension_semantics<parallel>], iteration_bounds = array<i64: 2>, scalar_prefetch = 1 : i64, scratch_operands = 0 : i64, tpu.core_type = #tpu.core_type<tc>, window_params = [{transform_indices = @transform_0, window_bounds = array<i64: 128, 8>}, {pipeline_mode = #tpu.pipeline_mode<synchronous>, transform_indices = @transform_1, window_bounds = array<i64: 32, 8>}, {pipeline_mode = #tpu.pipeline_mode<synchronous>, transform_indices = @transform_2, window_bounds = array<i64: 32, 1>}, {pipeline_mode = #tpu.pipeline_mode<synchronous>, transform_indices = @transform_3, window_bounds = array<i64: 32, 1>}, {pipeline_mode = #tpu.pipeline_mode<synchronous>, transform_indices = @transform_4, window_bounds = array<i64: 32, 32>}, {transform_indices = @transform_5, window_bounds = array<i64: 1, 128>}, {transform_indices = @transform_6, window_bounds = array<i64: 1, 128>}]} {
    %c0 = arith.constant 0 : index
    %0 = memref.load %arg1[%c0] : memref<3xf32, #tpu.memory_space<smem>>
    %c1 = arith.constant 1 : index
    %1 = memref.load %arg1[%c1] : memref<3xf32, #tpu.memory_space<smem>>
    %c2 = arith.constant 2 : index
    %2 = memref.load %arg1[%c2] : memref<3xf32, #tpu.memory_space<smem>>
    %c0_0 = arith.constant 0 : index
    %c0_1 = arith.constant 0 : index
    %3 = vector.load %arg2[%c0_0, %c0_1] : memref<128x8xf32, #tpu.memory_space<vmem>>, vector<128x8xf32>
    %c0_2 = arith.constant 0 : index
    %c0_3 = arith.constant 0 : index
    %4 = vector.load %arg3[%c0_2, %c0_3] : memref<32x8xf32, #tpu.memory_space<vmem>>, vector<32x8xf32>
    %5 = vector.broadcast %0 : f32 to vector<32x8xf32>
    %6 = arith.mulf %4, %5 : vector<32x8xf32>
    %cst = arith.constant dense<0.000000e+00> : vector<32x128xf32>
    %7 = tpu.matmul %6, %3, %cst {dimension_numbers = #tpu.dot_dimension_numbers<[1], [1], [0], [0], [0, 0, 1, 0], [], []>} : vector<32x8xf32>, vector<128x8xf32>, vector<32x128xf32> -> vector<32x128xf32>
    %cst_4 = arith.constant 1.000000e+00 : f32
    %8 = vector.broadcast %cst_4 : f32 to vector<1x8xf32>
    %9 = arith.mulf %3, %3 : vector<128x8xf32>
    %cst_5 = arith.constant dense<0.000000e+00> : vector<1x128xf32>
    %10 = tpu.matmul %8, %9, %cst_5 {dimension_numbers = #tpu.dot_dimension_numbers<[1], [1], [0], [0], [0, 0, 1, 0], [], []>} : vector<1x8xf32>, vector<128x8xf32>, vector<1x128xf32> -> vector<1x128xf32>
    %cst_6 = arith.constant -5.000000e-01 : f32
    %11 = arith.mulf %cst_6, %0 : f32
    %12 = vector.broadcast %11 : f32 to vector<1x128xf32>
    %13 = arith.mulf %12, %10 : vector<1x128xf32>
    %c0_7 = arith.constant 0 : index
    %c0_8 = arith.constant 0 : index
    %14 = vector.load %arg4[%c0_7, %c0_8] : memref<32x1xf32, #tpu.memory_space<vmem>>, vector<32x1xf32>
    %15 = vector.broadcast %14 : vector<32x1xf32> to vector<32x128xf32>
    %16 = arith.addf %7, %15 : vector<32x128xf32>
    %17 = vector.broadcast %13 : vector<1x128xf32> to vector<32x128xf32>
    %18 = arith.addf %16, %17 : vector<32x128xf32>
    %19 = vector.broadcast %1 : f32 to vector<32x128xf32>
    %20 = arith.minimumf %18, %19 : vector<32x128xf32>
    %21 = math.exp %20 : vector<32x128xf32>
    %c0_9 = arith.constant 0 : index
    %c0_10 = arith.constant 0 : index
    %22 = vector.load %arg6[%c0_9, %c0_10] : memref<32x32xf32, #tpu.memory_space<vmem>>, vector<32x32xf32>
    %cst_11 = arith.constant dense<0.000000e+00> : vector<32x128xf32>
    %23 = tpu.matmul %22, %21, %cst_11 {dimension_numbers = #tpu.dot_dimension_numbers<[1], [0], [0], [1], [0, 0, 1, 1], [], []>} : vector<32x32xf32>, vector<32x128xf32>, vector<32x128xf32> -> vector<32x128xf32>
    %c0_12 = arith.constant 0 : index
    %c0_13 = arith.constant 0 : index
    %24 = vector.load %arg5[%c0_12, %c0_13] : memref<32x1xf32, #tpu.memory_space<vmem>>, vector<32x1xf32>
    %25 = vector.broadcast %24 : vector<32x1xf32> to vector<32x128xf32>
    %26 = arith.mulf %25, %23 : vector<32x128xf32>
    %cst_14 = arith.constant dense<0.000000e+00> : vector<128xf32>
    %27 = vector.multi_reduction <add>, %26, %cst_14 [0] : vector<32x128xf32> to vector<128xf32>
    %28 = vector.shape_cast %27 : vector<128xf32> to vector<1x128xf32>
    %c0_15 = arith.constant 0 : index
    %c0_16 = arith.constant 0 : index
    %29 = vector.load %arg7[%c0_15, %c0_16] : memref<1x128xf32, #tpu.memory_space<vmem>>, vector<1x128xf32>
    tpu.vector_store %arg7[%c0_15, %c0_16], %28 {strides = array<i32>} : memref<1x128xf32, #tpu.memory_space<vmem>>, vector<1x128xf32>,
    %30 = arith.mulf %23, %21 : vector<32x128xf32>
    %cst_17 = arith.constant dense<0.000000e+00> : vector<128xf32>
    %31 = vector.multi_reduction <add>, %30, %cst_17 [0] : vector<32x128xf32> to vector<128xf32>
    %32 = vector.shape_cast %31 : vector<128xf32> to vector<1x128xf32>
    %33 = vector.broadcast %2 : f32 to vector<1x128xf32>
    %34 = arith.subf %33, %32 : vector<1x128xf32>
    %c0_18 = arith.constant 0 : index
    %c0_19 = arith.constant 0 : index
    %35 = vector.load %arg8[%c0_18, %c0_19] : memref<1x128xf32, #tpu.memory_space<vmem>>, vector<1x128xf32>
    tpu.vector_store %arg8[%c0_18, %c0_19], %34 {strides = array<i32>} : memref<1x128xf32, #tpu.memory_space<vmem>>, vector<1x128xf32>,
    return
  }
  func.func @transform_0(%arg0: i32, %arg1: memref<3xf32, #tpu.memory_space<smem>>) -> (i32, i32) {
    %c0_i32 = arith.constant 0 : i32
    %c0_i32_0 = arith.constant 0 : i32
    return %arg0, %c0_i32 : i32, i32
  }
  func.func @transform_1(%arg0: i32, %arg1: memref<3xf32, #tpu.memory_space<smem>>) -> (i32, i32) {
    %c0_i32 = arith.constant 0 : i32
    %c0_i32_0 = arith.constant 0 : i32
    %c0_i32_1 = arith.constant 0 : i32
    return %c0_i32, %c0_i32_0 : i32, i32
  }
  func.func @transform_2(%arg0: i32, %arg1: memref<3xf32, #tpu.memory_space<smem>>) -> (i32, i32) {
    %c0_i32 = arith.constant 0 : i32
    %c0_i32_0 = arith.constant 0 : i32
    %c0_i32_1 = arith.constant 0 : i32
    return %c0_i32, %c0_i32_0 : i32, i32
  }
  func.func @transform_3(%arg0: i32, %arg1: memref<3xf32, #tpu.memory_space<smem>>) -> (i32, i32) {
    %c0_i32 = arith.constant 0 : i32
    %c0_i32_0 = arith.constant 0 : i32
    %c0_i32_1 = arith.constant 0 : i32
    return %c0_i32, %c0_i32_0 : i32, i32
  }
  func.func @transform_4(%arg0: i32, %arg1: memref<3xf32, #tpu.memory_space<smem>>) -> (i32, i32) {
    %c0_i32 = arith.constant 0 : i32
    %c0_i32_0 = arith.constant 0 : i32
    %c0_i32_1 = arith.constant 0 : i32
    return %c0_i32, %c0_i32_0 : i32, i32
  }
  func.func @transform_5(%arg0: i32, %arg1: memref<3xf32, #tpu.memory_space<smem>>) -> (i32, i32) {
    %c0_i32 = arith.constant 0 : i32
    %c0_i32_0 = arith.constant 0 : i32
    return %c0_i32, %arg0 : i32, i32
  }
  func.func @transform_6(%arg0: i32, %arg1: memref<3xf32, #tpu.memory_space<smem>>) -> (i32, i32) {
    %c0_i32 = arith.constant 0 : i32
    %c0_i32_0 = arith.constant 0 : i32
    return %c0_i32, %arg0 : i32, i32
  }
}

</mosaic_0001>

<llo_original>
// kernel: tpu_custom_call.1
$region0: #{tpu_custom_call.1}
  #allocation0 [shape = 'u32[]', space=smem, size = 0x4, offset = 0x4, fixed_abs, tag = 'smem constant byte address 0x4 - core index']
  #allocation1 [shape = 'u32[72,128]{1,0:T(1,128)}', space=vmem, size = 0x9000, scoped, tag = 'internal scratch']
  #allocation2 [shape = 's32[1]{0}', space=sflag, size = 0x4, scoped, tag = 'scoped memory for tpu_custom_call.1']
  #allocation3 [shape = 'u8[512]{0}', space=smem, size = 0x200, scoped, tag = 'prefetched SMEM operand 0']
  %s0 = inlined_call_operand.vmem [shape: f32[3], index: 0, kind: input, shape index: {}]
  %s1 = inlined_call_operand.vmem [shape: f32[256,8], index: 1, kind: input, shape index: {}]
  %s2 = inlined_call_operand.vmem [shape: f32[32,8], index: 2, kind: input, shape index: {}]
  %s3 = inlined_call_operand.vmem [shape: f32[32,1], index: 3, kind: input, shape index: {}]
  %s4 = inlined_call_operand.vmem [shape: f32[32,1], index: 4, kind: input, shape index: {}]
  %s5 = inlined_call_operand.vmem [shape: f32[32,32], index: 5, kind: input, shape index: {}]
  %s6 = inlined_call_operand.hbm [shape: f32[1,256], index: 6, kind: output, shape index: {0}]
  %s7 = inlined_call_operand.hbm [shape: f32[1,256], index: 7, kind: output, shape index: {1}]
  %8 = xla_tuple %s6, %s7
  %s9 = sld [smem:[#allocation0]]
  $region61: #{tpu_custom_call.1} parent=0
    _
  %s11 = ssub.s32 1, %s9
  %s12 = scalar_select 0, %s11, %s9
  %s14 = sshll.u32 %s0, 4
  %s15 = int_to_ptr.vmem [resolvable:$true] %s14
  %17 = dma.vmem_to_smem %s15, 16, [#allocation3], [#allocation2]
  %19 = dma.done [#allocation2], 16
  %20 = sfence
  $region1: #{tpu_custom_call.1} parent=0
    #allocation4 [shape = 'u8[1024]{0}', space=vmem, size = 0x400, scoped, tag = 'output window, operand 0']
    #allocation5 [shape = 's32[2]{0}', space=sflag, size = 0x8, scoped, tag = 'scoped memory for tpu_custom_call.1']
    #allocation6 [shape = 'u8[1024]{0}', space=vmem, size = 0x400, scoped, tag = 'output window, operand 1']
    #allocation7 [shape = 's32[2]{0}', space=sflag, size = 0x8, scoped, tag = 'scoped memory for tpu_custom_call.1']
    %21 = vsyncpa [#allocation5], 0
    %s22 = scalar_lea.sflag [#allocation5], 1
    %23 = vsyncpa %s22, 0
    %24 = vsyncpa [#allocation7], 0
    %s25 = scalar_lea.sflag [#allocation7], 1
    %26 = vsyncpa %s25, 0
    loop: start=0, step=1, limit=4
    $region2: #{tpu_custom_call.1} parent=1 // loop_pre_header
      _
    $region3: #{tpu_custom_call.1} parent=1 // loop_header
      %s28 = sphi 0, %s32
      %p29 = scmp.ge.s32.totalorder %s28, 4
      %s38 = sphi 0, %s40
      %s41 = sphi 0, %s38
      %s42 = sphi 0, %s41
      %s58 = sphi 0, %s42
      %s62 = sphi 0, %s62
      %s64 = sphi 0, %s62
      %s65 = sphi 0, %s64
      %s79 = sphi 0, %s65
      %s83 = sphi 0, %s83
      %s85 = sphi 0, %s83
      %s86 = sphi 0, %s85
      %s100 = sphi 0, %s86
      %s104 = sphi 0, %s104
      %s106 = sphi 0, %s104
      %s107 = sphi 0, %s106
      %s121 = sphi 0, %s107
      %s125 = sphi 0, %s125
      %s127 = sphi 0, %s125
      %s128 = sphi 0, %s127
      %s142 = sphi 0, %s128
      %s148 = sphi 0, %s150
      %s151 = sphi 0, %s148
      %s152 = sphi 0, %s151
      %s168 = sphi 0, %s152
      %s174 = sphi 0, %s176
      %s177 = sphi 0, %s174
      %s178 = sphi 0, %s177
      %s194 = sphi 0, %s178
    $region4: #{tpu_custom_call.1} parent=1 // loop_header_branch
      %31 = sbr.rel (%p29) target = $region8
    $region5: #{tpu_custom_call.1} parent=1 // loop_body
      %s33 = ssub.s32 %s28, 1
      %s34 = ssub.s32 %s28, 2
      %s35 = sadd.s32 %s28, 1
      %s36 = ssub.s32 %s28, %s35
      %p37 = scmp.eq.s32.totalorder %s36, 0
      %s39 = sadd.s32 %s38, 1
      %s40 = scalar_select %p37, %s38, %s39
      %p43 = pneg %p37
      %p44 = scmp.eq.s32.totalorder %s28, 1
      %p45 = por %p43, %p44
      %p46 = scmp.ne.s32.totalorder %s38, %s41
      %p47 = scmp.eq.s32.totalorder %s28, 0
      %p48 = por %p46, %p47
      %p49 = scmp.ne.s32.totalorder %s38, %s41
      %p50 = scmp.eq.s32.totalorder %s33, 1
      %p51 = por %p49, %p50
      %p52 = scmp.ne.s32.totalorder %s41, %s42
      %p53 = scmp.eq.s32.totalorder %s33, 0
      %p54 = por %p52, %p53
      %p55 = scmp.ne.s32.totalorder %s41, %s42
      %p56 = scmp.eq.s32.totalorder %s34, 1
      %p57 = por %p55, %p56
      %p59 = scmp.ne.s32.totalorder %s42, %s58
      %p60 = scmp.eq.s32.totalorder %s34, 0
      %p61 = por %p59, %p60
      %s63 = sadd.s32 %s62, 1
      %p66 = scmp.eq.s32.totalorder %s28, 1
      %p67 = scmp.ne.s32.totalorder %s62, %s64
      %p68 = scmp.eq.s32.totalorder %s28, 0
      %p69 = por %p67, %p68
      %p70 = scmp.ne.s32.totalorder %s62, %s64
      %p71 = scmp.eq.s32.totalorder %s33, 1
      %p72 = por %p70, %p71
      %p73 = scmp.ne.s32.totalorder %s64, %s65
      %p74 = scmp.eq.s32.totalorder %s33, 0
      %p75 = por %p73, %p74
      %p76 = scmp.ne.s32.totalorder %s64, %s65
      %p77 = scmp.eq.s32.totalorder %s34, 1
      %p78 = por %p76, %p77
      %p80 = scmp.ne.s32.totalorder %s65, %s79
      %p81 = scmp.eq.s32.totalorder %s34, 0
      %p82 = por %p80, %p81
      %s84 = sadd.s32 %s83, 1
      %p87 = scmp.eq.s32.totalorder %s28, 1
      %p88 = scmp.ne.s32.totalorder %s83, %s85
      %p89 = scmp.eq.s32.totalorder %s28, 0
      %p90 = por %p88, %p89
      %p91 = scmp.ne.s32.totalorder %s83, %s85
      %p92 = scmp.eq.s32.totalorder %s33, 1
      %p93 = por %p91, %p92
      %p94 = scmp.ne.s32.totalorder %s85, %s86
      %p95 = scmp.eq.s32.totalorder %s33, 0
      %p96 = por %p94, %p95
      %p97 = scmp.ne.s32.totalorder %s85, %s86
      %p98 = scmp.eq.s32.totalorder %s34, 1
      %p99 = por %p97, %p98
      %p101 = scmp.ne.s32.totalorder %s86, %s100
      %p102 = scmp.eq.s32.totalorder %s34, 0
      %p103 = por %p101, %p102
      %s105 = sadd.s32 %s104, 1
      %p108 = scmp.eq.s32.totalorder %s28, 1
      %p109 = scmp.ne.s32.totalorder %s104, %s106
      %p110 = scmp.eq.s32.totalorder %s28, 0
      %p111 = por %p109, %p110
      %p112 = scmp.ne.s32.totalorder %s104, %s106
      %p113 = scmp.eq.s32.totalorder %s33, 1
      %p114 = por %p112, %p113
      %p115 = scmp.ne.s32.totalorder %s106, %s107
      %p116 = scmp.eq.s32.totalorder %s33, 0
      %p117 = por %p115, %p116
      %p118 = scmp.ne.s32.totalorder %s106, %s107
      %p119 = scmp.eq.s32.totalorder %s34, 1
      %p120 = por %p118, %p119
      %p122 = scmp.ne.s32.totalorder %s107, %s121
      %p123 = scmp.eq.s32.totalorder %s34, 0
      %p124 = por %p122, %p123
      %s126 = sadd.s32 %s125, 1
      %p129 = scmp.eq.s32.totalorder %s28, 1
      %p130 = scmp.ne.s32.totalorder %s125, %s127
      %p131 = scmp.eq.s32.totalorder %s28, 0
      %p132 = por %p130, %p131
      %p133 = scmp.ne.s32.totalorder %s125, %s127
      %p134 = scmp.eq.s32.totalorder %s33, 1
      %p135 = por %p133, %p134
      %p136 = scmp.ne.s32.totalorder %s127, %s128
      %p137 = scmp.eq.s32.totalorder %s33, 0
      %p138 = por %p136, %p137
      %p139 = scmp.ne.s32.totalorder %s127, %s128
      %p140 = scmp.eq.s32.totalorder %s34, 1
      %p141 = por %p139, %p140
      %p143 = scmp.ne.s32.totalorder %s128, %s142
      %p144 = scmp.eq.s32.totalorder %s34, 0
      %p145 = por %p143, %p144
      %s146 = ssub.s32 %s28, %s35
      %p147 = scmp.eq.s32.totalorder %s146, 0
      %s149 = sadd.s32 %s148, 1
      %s150 = scalar_select %p147, %s148, %s149
      %p153 = pneg %p147
      %p154 = scmp.eq.s32.totalorder %s28, 1
      %p155 = por %p153, %p154
      %p156 = scmp.ne.s32.totalorder %s148, %s151
      %p157 = scmp.eq.s32.totalorder %s28, 0
      %p158 = por %p156, %p157
      %p159 = scmp.ne.s32.totalorder %s148, %s151
      %p160 = scmp.eq.s32.totalorder %s33, 1
      %p161 = por %p159, %p160
      %p162 = scmp.ne.s32.totalorder %s151, %s152
      %p163 = scmp.eq.s32.totalorder %s33, 0
      %p164 = por %p162, %p163
      %p165 = scmp.ne.s32.totalorder %s151, %s152
      %p166 = scmp.eq.s32.totalorder %s34, 1
      %p167 = por %p165, %p166
      %p169 = scmp.ne.s32.totalorder %s152, %s168
      %p170 = scmp.eq.s32.totalorder %s34, 0
      %p171 = por %p169, %p170
      %s172 = ssub.s32 %s28, %s35
      %p173 = scmp.eq.s32.totalorder %s172, 0
      %s175 = sadd.s32 %s174, 1
      %s176 = scalar_select %p173, %s174, %s175
      %p179 = pneg %p173
      %p180 = scmp.eq.s32.totalorder %s28, 1
      %p181 = por %p179, %p180
      %p182 = scmp.ne.s32.totalorder %s174, %s177
      %p183 = scmp.eq.s32.totalorder %s28, 0
      %p184 = por %p182, %p183
      %p185 = scmp.ne.s32.totalorder %s174, %s177
      %p186 = scmp.eq.s32.totalorder %s33, 1
      %p187 = por %p185, %p186
      %p188 = scmp.ne.s32.totalorder %s177, %s178
      %p189 = scmp.eq.s32.totalorder %s33, 0
      %p190 = por %p188, %p189
      %p191 = scmp.ne.s32.totalorder %s177, %s178
      %p192 = scmp.eq.s32.totalorder %s34, 1
      %p193 = por %p191, %p192
      %p195 = scmp.ne.s32.totalorder %s178, %s194
      %p196 = scmp.eq.s32.totalorder %s34, 0
      %p197 = por %p195, %p196
      %p198 = scmp.le.s32.totalorder 1, %s28
      %p199 = scmp.lt.s32.totalorder %s28, 3
      %p200 = pnand %p198, %p199
      %p201 = pneg %p200
      // Predicated region
      $region9: #{tpu_custom_call.1} parent=5 // pred_check
        _
      $region10: #{tpu_custom_call.1} parent=5 // pred_check_branch
        %203 = sbr.rel (%p200) target = $region12
      $region11: #{tpu_custom_call.1} parent=5 // pred_region
        %s204 = ssub.s32 %s28, 1
        // Predicated region
        $region13: #{tpu_custom_call.1} parent=11 // pred_check
          %p205 = pneg %p75
        $region14: #{tpu_custom_call.1} parent=11 // pred_check_branch
          %207 = sbr.rel (%p205) target = $region16
        $region15: #{tpu_custom_call.1} parent=11 // pred_region
          _
        $region16: #{tpu_custom_call.1} parent=11 // pred_fallthru
          _
        // Predicated region
        $region17: #{tpu_custom_call.1} parent=11 // pred_check
          %p208 = pneg %p96
        $region18: #{tpu_custom_call.1} parent=11 // pred_check_branch
          %210 = sbr.rel (%p208) target = $region20
        $region19: #{tpu_custom_call.1} parent=11 // pred_region
          _
        $region20: #{tpu_custom_call.1} parent=11 // pred_fallthru
          _
        // Predicated region
        $region21: #{tpu_custom_call.1} parent=11 // pred_check
          %p211 = pneg %p117
        $region22: #{tpu_custom_call.1} parent=11 // pred_check_branch
          %213 = sbr.rel (%p211) target = $region24
        $region23: #{tpu_custom_call.1} parent=11 // pred_region
          _
        $region24: #{tpu_custom_call.1} parent=11 // pred_fallthru
          _
        // Predicated region
        $region25: #{tpu_custom_call.1} parent=11 // pred_check
          %p214 = pneg %p138
        $region26: #{tpu_custom_call.1} parent=11 // pred_check_branch
          %216 = sbr.rel (%p214) target = $region28
        $region27: #{tpu_custom_call.1} parent=11 // pred_region
          _
        $region28: #{tpu_custom_call.1} parent=11 // pred_fallthru
          _
      $region12: #{tpu_custom_call.1} parent=5 // pred_fallthru
        _
      %p217 = scmp.lt.s32.totalorder %s28, 2
      // Predicated region
      $region29: #{tpu_custom_call.1} parent=5 // pred_check
        %p218 = pneg %p217
      $region30: #{tpu_custom_call.1} parent=5 // pred_check_branch
        %220 = sbr.rel (%p218) target = $region32
      $region31: #{tpu_custom_call.1} parent=5 // pred_region
        // Predicated region
        $region33: #{tpu_custom_call.1} parent=31 // pred_check
          %p221 = pneg %p48
        $region34: #{tpu_custom_call.1} parent=31 // pred_check_branch
          %223 = sbr.rel (%p221) target = $region36
        $region35: #{tpu_custom_call.1} parent=31 // pred_region
          %s224 = smul.u32 16, %s28
          %p225 = scmp.lt.s32.totalorder %s224, 31
          %s226 = scalar_select %p225, %s224, 31
          %s227 = smul.addr %s226, 8
          %s228 = scalar_lea.vmem %s1, %s227
          %s229 = smul.u32 16, %s28
        $region36: #{tpu_custom_call.1} parent=31 // pred_fallthru
          _
      $region32: #{tpu_custom_call.1} parent=5 // pred_fallthru
        _
      %p230 = scmp.le.s32.totalorder 1, %s28
      %p231 = scmp.lt.s32.totalorder %s28, 3
      %p232 = pnand %p230, %p231
      %p233 = pneg %p232
      // Predicated region
      $region37: #{tpu_custom_call.1} parent=5 // pred_check
        _
      $region38: #{tpu_custom_call.1} parent=5 // pred_check_branch
        %235 = sbr.rel (%p232) target = $region40
      $region39: #{tpu_custom_call.1} parent=5 // pred_region
        %s236 = ssub.s32 %s28, 1
        %s237 = smul.u32 16, %s33
        %p238 = scmp.lt.s32.totalorder %s237, 31
        %s239 = scalar_select %p238, %s237, 31
        %s240 = smul.addr %s239, 8
        %s241 = scalar_lea.vmem %s1, %s240
        %p242 = pneg %p54
        %p243 = pneg %p51
        %p244 = pneg %p75
        %p245 = pneg %p72
        %p246 = pneg %p96
        %p247 = pneg %p93
        %p248 = pneg %p117
        %p249 = pneg %p114
        %p250 = pneg %p138
        %p251 = pneg %p135
        %p252 = pneg %p164
        %p253 = pneg %p161
        %s254 = sand.u32 %s151, 1
        %s255 = scalar_lea.sflag [#allocation5], %s254
        %s256 = sand.u32 %s151, 1
        %s257 = scalar_lea.vmem [#allocation4], %s256
        %p258 = pneg %p190
        %p259 = pneg %p187
        %s260 = sand.u32 %s177, 1
        %s261 = scalar_lea.sflag [#allocation7], %s260
        %s262 = sand.u32 %s177, 1
        %s263 = scalar_lea.vmem [#allocation6], %s262
        %s264 = smul.u32 16, %s33
        %p265 = scmp.lt.s32.totalorder %s264, 31
        %s266 = scalar_select %p265, %s264, 31
        %s267 = smul.addr %s266, 8
        %s268 = scalar_lea.vmem %s1, %s267
        %s269 = smul.u32 16, %s33
        %s270 = sld [smem:[#allocation3]]
        %s271 = sld [smem:[#allocation3 + $0x1]]
        %s272 = sld [smem:[#allocation3 + $0x2]]
        %v273 = vld [vmem:[%s268] sm:$0xff]
        %v274 = vld [vmem:[%s268 + $0x8] sm:$0xff]
        %v275 = vld [vmem:[%s268 + $0x10] sm:$0xff]
        %v276 = vld [vmem:[%s268 + $0x18] sm:$0xff]
        %v277 = vld [vmem:[%s268 + $0x20] sm:$0xff]
        %v278 = vld [vmem:[%s268 + $0x28] sm:$0xff]
        %v279 = vld [vmem:[%s268 + $0x30] sm:$0xff]
        %v280 = vld [vmem:[%s268 + $0x38] sm:$0xff]
        %v281 = vld [vmem:[%s268 + $0x40] sm:$0xff]
        %v282 = vld [vmem:[%s268 + $0x48] sm:$0xff]
        %v283 = vld [vmem:[%s268 + $0x50] sm:$0xff]
        %v284 = vld [vmem:[%s268 + $0x58] sm:$0xff]
        %v285 = vld [vmem:[%s268 + $0x60] sm:$0xff]
        %v286 = vld [vmem:[%s268 + $0x68] sm:$0xff]
        %v287 = vld [vmem:[%s268 + $0x70] sm:$0xff]
        %v288 = vld [vmem:[%s268 + $0x78] sm:$0xff]
        %v289 = vld [vmem:[%s2] sm:$0xff]
        %v290 = vld [vmem:[%s2 + $0x8] sm:$0xff]
        %v291 = vld [vmem:[%s2 + $0x10] sm:$0xff]
        %v292 = vld [vmem:[%s2 + $0x18] sm:$0xff]
        %v293 = vstv %s270
        %v294 = vmul.f32 %v289, %v293
        %v295 = vmul.f32 %v290, %v293
        %v296 = vmul.f32 %v291, %v293
        %v297 = vmul.f32 %v292, %v293
        %v298 = vmul.f32 %v273, %v273
        %v299 = vmul.f32 %v274, %v274
        %v300 = vmul.f32 %v275, %v275
        %v301 = vmul.f32 %v276, %v276
        %v302 = vmul.f32 %v277, %v277
        %v303 = vmul.f32 %v278, %v278
        %v304 = vmul.f32 %v279, %v279
        %v305 = vmul.f32 %v280, %v280
        %v306 = vmul.f32 %v281, %v281
        %v307 = vmul.f32 %v282, %v282
        %v308 = vmul.f32 %v283, %v283
        %v309 = vmul.f32 %v284, %v284
        %v310 = vmul.f32 %v285, %v285
        %v311 = vmul.f32 %v286, %v286
        %v312 = vmul.f32 %v287, %v287
        %v313 = vmul.f32 %v288, %v288
        %vm314 = vcmask 64512
        %v316 = vsel %vm314, 1.0, 0
        %v319 = vsel %vm314, %v298, 0
        %v322 = vsel %vm314, %v299, 0
        %v325 = vsel %vm314, %v300, 0
        %v328 = vsel %vm314, %v301, 0
        %v331 = vsel %vm314, %v302, 0
        %v334 = vsel %vm314, %v303, 0
        %v337 = vsel %vm314, %v304, 0
        %v340 = vsel %vm314, %v305, 0
        %v343 = vsel %vm314, %v306, 0
        %v346 = vsel %vm314, %v307, 0
        %v349 = vsel %vm314, %v308, 0
        %v352 = vsel %vm314, %v309, 0
        %v355 = vsel %vm314, %v310, 0
        %v358 = vsel %vm314, %v311, 0
        %v361 = vsel %vm314, %v312, 0
        %v364 = vsel %vm314, %v313, 0
        %366 = vmatpush.xpose.msra.mxu0 %v364
        %367 = vmatpush.xpose.msra.mxu0 %v361
        %368 = vmatpush.xpose.msra.mxu0 %v358
        %369 = vmatpush.xpose.msra.mxu0 %v355
        %370 = vmatpush.xpose.msra.mxu0 %v352
        %371 = vmatpush.xpose.msra.mxu0 %v349
        %372 = vmatpush.xpose.msra.mxu0 %v346
        %373 = vmatpush.xpose.msra.mxu0 %v343
        %374 = vmatpush.xpose.msra.mxu0 %v340
        %375 = vmatpush.xpose.msra.mxu0 %v337
        %376 = vmatpush.xpose.msra.mxu0 %v334
        %377 = vmatpush.xpose.msra.mxu0 %v331
        %378 = vmatpush.xpose.msra.mxu0 %v328
        %379 = vmatpush.xpose.msra.mxu0 %v325
        %380 = vmatpush.xpose.msra.mxu0 %v322
        %381 = vmatpush.xpose.msra.mxu0 %v319
        %382 = vmatmul.f32.gmra.mxu0 %v316
        %v383 = vpop.f32.mrf.mxu0
        %v384 = vadd.f32 0.0, %v383
        %385 = vdwg.mxu0
        %s386 = smul.f32 %s270, -0.5
        %v387 = vstv %s386
        %v388 = vmul.f32 %v387, %v384
        %v389 = vld [vmem:[%s3] sm:$0xff]
        %v390 = vld [vmem:[%s3 + $0x8] sm:$0xff]
        %v391 = vld [vmem:[%s3 + $0x10] sm:$0xff]
        %v392 = vld [vmem:[%s3 + $0x18] sm:$0xff]
        %394 = vset.pattern.permute.xlu0 0
        %395 = vperm.xlu0 %394, %v389
        %v396 = vpop.permute.xlu0 %395
        %399 = vset.pattern.permute.xlu0 0
        %400 = vperm.xlu0 %399, %v390
        %v401 = vpop.permute.xlu0 %400
        %404 = vset.pattern.permute.xlu0 0
        %405 = vperm.xlu0 %404, %v391
        %v406 = vpop.permute.xlu0 %405
        %409 = vset.pattern.permute.xlu0 0
        %410 = vperm.xlu0 %409, %v392
        %v411 = vpop.permute.xlu0 %410
        %v414 = vsel %vm314, %v294, 0
        %v417 = vsel %vm314, %v295, 0
        %v420 = vsel %vm314, %v296, 0
        %v423 = vsel %vm314, %v297, 0
        %v426 = vsel %vm314, %v273, 0
        %v429 = vsel %vm314, %v274, 0
        %v432 = vsel %vm314, %v275, 0
        %v435 = vsel %vm314, %v276, 0
        %v438 = vsel %vm314, %v277, 0
        %v441 = vsel %vm314, %v278, 0
        %v444 = vsel %vm314, %v279, 0
        %v447 = vsel %vm314, %v280, 0
        %v450 = vsel %vm314, %v281, 0
        %v453 = vsel %vm314, %v282, 0
        %v456 = vsel %vm314, %v283, 0
        %v459 = vsel %vm314, %v284, 0
        %v462 = vsel %vm314, %v285, 0
        %v465 = vsel %vm314, %v286, 0
        %v468 = vsel %vm314, %v287, 0
        %v471 = vsel %vm314, %v288, 0
        %473 = vmatpush.xpose.msra.mxu0 %v471
        %474 = vmatpush.xpose.msra.mxu0 %v468
        %475 = vmatpush.xpose.msra.mxu0 %v465
        %476 = vmatpush.xpose.msra.mxu0 %v462
        %477 = vmatpush.xpose.msra.mxu0 %v459
        %478 = vmatpush.xpose.msra.mxu0 %v456
        %479 = vmatpush.xpose.msra.mxu0 %v453
        %480 = vmatpush.xpose.msra.mxu0 %v450
        %481 = vmatpush.xpose.msra.mxu0 %v447
        %482 = vmatpush.xpose.msra.mxu0 %v444
        %483 = vmatpush.xpose.msra.mxu0 %v441
        %484 = vmatpush.xpose.msra.mxu0 %v438
        %485 = vmatpush.xpose.msra.mxu0 %v435
        %486 = vmatpush.xpose.msra.mxu0 %v432
        %487 = vmatpush.xpose.msra.mxu0 %v429
        %488 = vmatpush.xpose.msra.mxu0 %v426
        %489 = vmatmul.f32.gmra.mxu0 %v414
        %v490 = vpop.f32.mrf.mxu0
        %v491 = vadd.f32 %v396, %v490
        %492 = vmatmul.f32.gmra.mxu0 %v417
        %v493 = vpop.f32.mrf.mxu0
        %v494 = vadd.f32 %v401, %v493
        %495 = vmatmul.f32.gmra.mxu0 %v420
        %v496 = vpop.f32.mrf.mxu0
        %v497 = vadd.f32 %v406, %v496
        %498 = vmatmul.f32.gmra.mxu0 %v423
        %v499 = vpop.f32.mrf.mxu0
        %v500 = vadd.f32 %v411, %v499
        %501 = vdwg.mxu0
        %v502 = vperm.slane %v388, 0
        %v503 = vadd.f32 %v491, %v502
        %v504 = vadd.f32 %v494, %v502
        %v505 = vadd.f32 %v497, %v502
        %v506 = vadd.f32 %v500, %v502
        %v507 = vstv %s271
        %v508 = vmin.f32 %v503, %v507
        %v509 = vmin.f32 %v504, %v507
        %v510 = vmin.f32 %v505, %v507
        %v511 = vmin.f32 %v506, %v507
        %v512 = vmul.f32 %v508, 1.442695
        %v513 = vpow.pop %v512
        %v514 = vmul.f32 %v509, 1.442695
        %v515 = vpow.pop %v514
        %v516 = vmul.f32 %v510, 1.442695
        %v517 = vpow.pop %v516
        %v518 = vmul.f32 %v511, 1.442695
        %v519 = vpow.pop %v518
        %v520 = vld [vmem:[%s5] sm:$0xff]
        %v521 = vld [vmem:[%s5 + $0x8] sm:$0xff]
        %v522 = vld [vmem:[%s5 + $0x10] sm:$0xff]
        %v523 = vld [vmem:[%s5 + $0x18] sm:$0xff]
        %vm524 = vcmask 261120
        %v526 = vsel %vm524, %v520, 0
        %v529 = vsel %vm524, %v521, 0
        %v532 = vsel %vm524, %v522, 0
        %v535 = vsel %vm524, %v523, 0
        %537 = vmatpush.msra.mxu0 0.0
        %538 = vmatpush.msra.mxu0 0.0
        %539 = vmatpush.msra.mxu0 0.0
        %540 = vmatpush.msra.mxu0 0.0
        %541 = vmatpush.msra.mxu0 0.0
        %542 = vmatpush.msra.mxu0 0.0
        %543 = vmatpush.msra.mxu0 0.0
        %544 = vmatpush.msra.mxu0 0.0
        %545 = vmatpush.msra.mxu0 0.0
        %546 = vmatpush.msra.mxu0 0.0
        %547 = vmatpush.msra.mxu0 0.0
        %548 = vmatpush.msra.mxu0 0.0
        %549 = vmatpush.msra.mxu0 %v519
        %550 = vmatpush.msra.mxu0 %v517
        %551 = vmatpush.msra.mxu0 %v515
        %552 = vmatpush.msra.mxu0 %v513
        %553 = vmatmul.f32.gmra.mxu0 %v526
        %v554 = vpop.f32.mrf.mxu0
        %v555 = vadd.f32 0.0, %v554
        %556 = vmatmul.f32.gmra.mxu0 %v529
        %v557 = vpop.f32.mrf.mxu0
        %v558 = vadd.f32 0.0, %v557
        %559 = vmatmul.f32.gmra.mxu0 %v532
        %v560 = vpop.f32.mrf.mxu0
        %v561 = vadd.f32 0.0, %v560
        %562 = vmatmul.f32.gmra.mxu0 %v535
        %v563 = vpop.f32.mrf.mxu0
        %v564 = vadd.f32 0.0, %v563
        %565 = vdwg.mxu0
        %v566 = vld [vmem:[%s4] sm:$0xff]
        %v567 = vld [vmem:[%s4 + $0x8] sm:$0xff]
        %v568 = vld [vmem:[%s4 + $0x10] sm:$0xff]
        %v569 = vld [vmem:[%s4 + $0x18] sm:$0xff]
        %571 = vset.pattern.permute.xlu0 0
        %572 = vperm.xlu0 %571, %v566
        %v573 = vpop.permute.xlu0 %572
        %576 = vset.pattern.permute.xlu0 0
        %577 = vperm.xlu0 %576, %v567
        %v578 = vpop.permute.xlu0 %577
        %581 = vset.pattern.permute.xlu0 0
        %582 = vperm.xlu0 %581, %v568
        %v583 = vpop.permute.xlu0 %582
        %586 = vset.pattern.permute.xlu0 0
        %587 = vperm.xlu0 %586, %v569
        %v588 = vpop.permute.xlu0 %587
        %v590 = vmul.f32 %v573, %v555
        %v591 = vmul.f32 %v578, %v558
        %v592 = vmul.f32 %v583, %v561
        %v593 = vmul.f32 %v588, %v564
        %v594 = vadd.f32 %v590, %v591
        %v595 = vadd.f32 %v594, %v592
        %v596 = vadd.f32 %v595, %v593
        %v597 = vrot.slane %v596, 4
        %v598 = vadd.f32 %v596, %v597
        %v599 = vrot.slane %v598, 2
        %v600 = vadd.f32 %v598, %v599
        %v601 = vrot.slane %v600, 1
        %v602 = vadd.f32 %v600, %v601
        %603 = vst [vmem:[%s257] sm:$0x1] %v602
        %v604 = vmul.f32 %v555, %v513
        %v605 = vmul.f32 %v558, %v515
        %v606 = vmul.f32 %v561, %v517
        %v607 = vmul.f32 %v564, %v519
        %v608 = vadd.f32 %v604, %v605
        %v609 = vadd.f32 %v608, %v606
        %v610 = vadd.f32 %v609, %v607
        %v611 = vrot.slane %v610, 4
        %v612 = vadd.f32 %v610, %v611
        %v613 = vrot.slane %v612, 2
        %v614 = vadd.f32 %v612, %v613
        %v615 = vrot.slane %v614, 1
        %v616 = vadd.f32 %v614, %v615
        %v617 = vstv %s272
        %v618 = vsub.f32 %v617, %v616
        %619 = vst [vmem:[%s263] sm:$0x1] %v618
        %s620 = sand.u32 %s151, 1
        %s621 = scalar_lea.sflag [#allocation5], %s620
        %s622 = sand.u32 %s151, 1
        %s623 = scalar_lea.vmem [#allocation4], %s622
        %s624 = sand.u32 %s177, 1
        %s625 = scalar_lea.sflag [#allocation7], %s624
        %s626 = sand.u32 %s177, 1
        %s627 = scalar_lea.vmem [#allocation6], %s626
        // Predicated region
        $region41: #{tpu_custom_call.1} parent=39 // pred_check
          %p628 = pneg %p161
        $region42: #{tpu_custom_call.1} parent=39 // pred_check_branch
          %630 = sbr.rel (%p628) target = $region44
        $region43: #{tpu_custom_call.1} parent=39 // pred_region
          %632 = vsyncadd %s621, 0
          %s633 = scalar_lea.hbm %s6, %s33
          %s635 = sshll.u32 %s623, 4
          %s636 = int_to_ptr.vmem [resolvable:$true] %s635
          %s637 = sshll.u32 %s633, 4
          %s638 = int_to_ptr.hbm [resolvable:$true] %s637
          %640 = dma.vmem_to_hbm [thread:$0]  %s636, 16, %s638, %s621
        $region44: #{tpu_custom_call.1} parent=39 // pred_fallthru
          _
        // Predicated region
        $region45: #{tpu_custom_call.1} parent=39 // pred_check
          %p641 = pneg %p187
        $region46: #{tpu_custom_call.1} parent=39 // pred_check_branch
          %643 = sbr.rel (%p641) target = $region48
        $region47: #{tpu_custom_call.1} parent=39 // pred_region
          %645 = vsyncadd %s625, 0
          %s646 = scalar_lea.hbm %s7, %s33
          %s648 = sshll.u32 %s627, 4
          %s649 = int_to_ptr.vmem [resolvable:$true] %s648
          %s650 = sshll.u32 %s646, 4
          %s651 = int_to_ptr.hbm [resolvable:$true] %s650
          %653 = dma.vmem_to_hbm [thread:$0]  %s649, 16, %s651, %s625
        $region48: #{tpu_custom_call.1} parent=39 // pred_fallthru
          _
      $region40: #{tpu_custom_call.1} parent=5 // pred_fallthru
        _
      %p654 = scmp.le.s32.totalorder 2, %s28
      // Predicated region
      $region49: #{tpu_custom_call.1} parent=5 // pred_check
        %p655 = pneg %p654
      $region50: #{tpu_custom_call.1} parent=5 // pred_check_branch
        %657 = sbr.rel (%p655) target = $region52
      $region51: #{tpu_custom_call.1} parent=5 // pred_region
        %s658 = ssub.s32 %s28, 2
        // Predicated region
        $region53: #{tpu_custom_call.1} parent=51 // pred_check
          %p659 = pneg %p167
        $region54: #{tpu_custom_call.1} parent=51 // pred_check_branch
          %661 = sbr.rel (%p659) target = $region56
        $region55: #{tpu_custom_call.1} parent=51 // pred_region
          %s662 = sand.u32 %s152, 1
          %s663 = scalar_lea.sflag [#allocation5], %s662
          %s664 = sand.u32 %s152, 1
          %s665 = scalar_lea.vmem [#allocation4], %s664
          %667 = dma.done %s663, 16
        $region56: #{tpu_custom_call.1} parent=51 // pred_fallthru
          _
        // Predicated region
        $region57: #{tpu_custom_call.1} parent=51 // pred_check
          %p668 = pneg %p193
        $region58: #{tpu_custom_call.1} parent=51 // pred_check_branch
          %670 = sbr.rel (%p668) target = $region60
        $region59: #{tpu_custom_call.1} parent=51 // pred_region
          %s671 = sand.u32 %s178, 1
          %s672 = scalar_lea.sflag [#allocation7], %s671
          %s673 = sand.u32 %s178, 1
          %s674 = scalar_lea.vmem [#allocation6], %s673
          %676 = dma.done %s672, 16
        $region60: #{tpu_custom_call.1} parent=51 // pred_fallthru
          _
      $region52: #{tpu_custom_call.1} parent=5 // pred_fallthru
        _
    $region6: #{tpu_custom_call.1} parent=1 // loop_footer
      %s32 = sadd.s32 1, %s28
    $region7: #{tpu_custom_call.1} parent=1 // loop_footer_branch
      %27 = sbr.rel target = $region3
    $region8: #{tpu_custom_call.1} parent=1 // loop_exit
      _
    %677 = vsyncpa [#allocation5], 1
    %s678 = scalar_lea.sflag [#allocation5], 1
    %679 = vsyncpa %s678, 1
    %680 = vsyncpa [#allocation7], 1
    %s681 = scalar_lea.sflag [#allocation7], 1
    %682 = vsyncpa %s681, 1

</llo_original>
